<compile_context>
chip_gen: v6e
topology: v6e:2x2x1
jax: 0.10.0
libtpu: 0.0.40
codegen_flags: <defaults>
</compile_context>

<pallas_src>
import functools

import jax
import jax.numpy as jnp
from jax.experimental import pallas as pl
from jax.experimental.pallas import tpu as pltpu


# --------------------------------------------------------------------------
# Path A: whole table resident in VMEM, gather with dynamic VMEM row loads.
# --------------------------------------------------------------------------
def _mean_tbl_vmem_kernel(idx_smem, tbl_ref, o_ref, *, seq_len, bt):
    # idx_smem: (Bp*S,) int32 indices, scalar-prefetched into SMEM (flat 1-D).
    # tbl_ref:  (F, E) float32 table, fully resident in VMEM (fetched once).
    # o_ref:    (BT, E) float32 output block for this batch tile.
    i = pl.program_id(0)
    emb = tbl_ref.shape[1]
    base = i * (bt * seq_len)
    inv_s = jnp.float32(1.0 / seq_len)

    rows = []
    for r in range(bt):  # bt == 8: small static unroll, keeps store dense
        def body(s, acc, _r=r):
            idx = idx_smem[base + _r * seq_len + s]
            return acc + tbl_ref[pl.ds(idx, 1), :]          # (1, E) f32 row

        acc = jax.lax.fori_loop(0, seq_len, body,
                                jnp.zeros((1, emb), jnp.float32))
        rows.append(acc)

    # Single lane+sublane-dense (BT, E) store instead of BT masked row stores.
    o_ref[...] = (jnp.concatenate(rows, axis=0) * inv_s).astype(o_ref.dtype)


# --------------------------------------------------------------------------
# Path B: table stays in HBM; Pallas-pipelined pl.Element row gather.
# --------------------------------------------------------------------------
def _mean_gather_kernel(idx_smem, row_ref, o_ref, *, seq_len):
    # idx_smem consumed only by the index_map (scalar prefetch).
    del idx_smem
    s = pl.program_id(1)

    @pl.when(s == 0)
    def _():
        o_ref[...] = jnp.zeros_like(o_ref)

    o_ref[...] += row_ref[...].astype(jnp.float32).reshape(o_ref.shape)

    @pl.when(s == pl.num_programs(1) - 1)
    def _():
        o_ref[...] = o_ref[...] * jnp.float32(1.0 / seq_len)


# --------------------------------------------------------------------------
# Wrapper / dispatch
# --------------------------------------------------------------------------
def embedding_unit_layer(x, table, meaning=True, force_path=None):
    """x: (B, S) integer indices; table: (F, E) float32 embedding weights.

    meaning=True  -> (B, E) float32 mean over the seq dim (Pallas kernels).
    meaning=False -> (B, S, E) float32 plain gather.
    force_path: None (auto), "resident", or "gather" (for testing).
    """
    if not meaning:
        # TODO(synk): meaning=False is a pure gather with no reduction; left
        # as plain XLA gather rather than a Pallas kernel.
        return jnp.take(table, x.astype(jnp.int32), axis=0)

    B, S = x.shape
    F, E = table.shape
    table = table.astype(jnp.float32)
    # PyTorch raises on out-of-range indices; clamp defensively instead
    # (TPU DMA has no bounds check; matches jnp.take's clipping behaviour).
    x = jnp.clip(x.astype(jnp.int32), 0, F - 1)

    # Per-chip VMEM budget (64 MiB on v7x, 128 MiB on v5e/v6e).
    try:
        vmem_cap = int(pltpu.get_tpu_info().vmem_capacity_bytes)
    except Exception:
        vmem_cap = 64 << 20  # conservative fallback: v7x per-TensorCore VMEM

    BT = 8                                 # sublane-dense batch tile
    table_bytes = F * E * 4
    # Table may be double-buffered by the pipeline + double-buffered output
    # tiles + slack for internal scratch.
    resident_need = 2 * table_bytes + 4 * BT * E * 4 + (4 << 20)
    use_resident = (force_path == "resident") or (
        force_path is None and resident_need <= int(0.85 * vmem_cap))

    if use_resident:
        # ---------------- Path A: table resident in VMEM ----------------
        Bp = ((B + BT - 1) // BT) * BT
        x_flat = jnp.pad(x, ((0, Bp - B), (0, 0))).reshape(-1)   # 1-D for SMEM
        vmem_limit = min(max(resident_need, 32 << 20), int(0.9 * vmem_cap))

        out = pl.pallas_call(
            functools.partial(_mean_tbl_vmem_kernel, seq_len=S, bt=BT),
            out_shape=jax.ShapeDtypeStruct((Bp, E), jnp.float32),
            grid_spec=pltpu.PrefetchScalarGridSpec(
                num_scalar_prefetch=1,                       # x -> SMEM
                grid=(Bp // BT,),
                in_specs=[
                    # Full-extent block, constant block index => fetched once.
                    pl.BlockSpec((F, E), lambda i, idx: (0, 0)),
                ],
                out_specs=pl.BlockSpec((BT, E), lambda i, idx: (i, 0)),
            ),
            compiler_params=pltpu.CompilerParams(
                dimension_semantics=("parallel",),           # megacore on v7x
                vmem_limit_bytes=vmem_limit,
            ),
        )(x_flat, table)
        return out[:B]

    # ---------------- Path B: HBM row gather via pl.Element ----------------
    x_flat = x.reshape(-1)                                   # (B*S,) 1-D int32
    out = pl.pallas_call(
        functools.partial(_mean_gather_kernel, seq_len=S),
        out_shape=jax.ShapeDtypeStruct((B, 1, E), jnp.float32),
        grid_spec=pltpu.PrefetchScalarGridSpec(
            num_scalar_prefetch=1,                           # x -> SMEM
            grid=(B, S),
            in_specs=[
                # Row gather: element offset along F taken from the prefetched
                # index array; Pallas generates the pipelined (1, E) DMAs.
                pl.BlockSpec((pl.Element(1), E),
                             lambda b, s, idx: (idx[b * S + s], 0)),
            ],
            out_specs=pl.BlockSpec((1, 1, E), lambda b, s, idx: (b, 0, 0)),
        ),
        compiler_params=pltpu.CompilerParams(
            dimension_semantics=("parallel", "arbitrary"),
            vmem_limit_bytes=min(32 << 20, int(0.9 * vmem_cap)),
        ),
    )(x_flat, table)
    return out.reshape(B, E)


if __name__ == "__main__":
    # Small shapes consistent with the module.
    features_size = 64      # F
    embedding_size = 32     # E
    batch = 4               # B
    seq = 8                 # S

    key = jax.random.PRNGKey(0)
    k_w, k_x = jax.random.split(key)

    # Deterministic init mirroring torch.nn.init.normal_(std=1e-4).
    table = (jax.random.normal(k_w, (features_size, embedding_size), jnp.float32)
             * 1e-4)
    x = jax.random.randint(k_x, (batch, seq), 0, features_size, dtype=jnp.int32)

    # Pure-JAX reference.
    ref = jnp.mean(jnp.take(table, x, axis=0), axis=1)

    # Path A (auto-dispatched at these shapes: table is tiny -> VMEM-resident).
    out_a = jax.block_until_ready(embedding_unit_layer(x, table, meaning=True))
    assert out_a.shape == (batch, embedding_size)
    assert jnp.allclose(out_a, ref, atol=1e-6, rtol=1e-5), "resident path mismatch"

    # Path B (forced: exercises the huge-table HBM row-gather fallback).
    out_b = jax.block_until_ready(
        embedding_unit_layer(x, table, meaning=True, force_path="gather"))
    assert out_b.shape == (batch, embedding_size)
    assert jnp.allclose(out_b, ref, atol=1e-6, rtol=1e-5), "gather path mismatch"

    print("KERNEL_OK")
</pallas_src>

<mosaic_0001>
module attributes {stable_mosaic.version = 11 : i64} {
  func.func @_mean_tbl_vmem_kernel(%arg0: i32, %arg1: memref<64xi32, #tpu.memory_space<smem>>, %arg2: memref<64x32xf32, #tpu.memory_space<vmem>>, %arg3: memref<8x32xf32, #tpu.memory_space<vmem>>) attributes {dimension_semantics = [#tpu.dimension_semantics<parallel>], iteration_bounds = array<i64: 1>, scalar_prefetch = 1 : i64, scratch_operands = 0 : i64, tpu.core_type = #tpu.core_type<tc>, window_params = [{pipeline_mode = #tpu.pipeline_mode<synchronous>, transform_indices = @transform_0, window_bounds = array<i64: 64, 32>}, {transform_indices = @transform_1, window_bounds = array<i64: 8, 32>}]} {
    %c64_i32 = arith.constant 64 : i32
    %0 = arith.muli %arg0, %c64_i32 : i32
    %cst = arith.constant 0.000000e+00 : f32
    %1 = vector.broadcast %cst : f32 to vector<1x32xf32>
    %c0_i32 = arith.constant 0 : i32
    %c8_i32 = arith.constant 8 : i32
    %2 = arith.addi %c0_i32, %c8_i32 : i32
    %c1_i32 = arith.constant 1 : i32
    %3 = scf.for %arg4 = %c0_i32 to %2 step %c1_i32 iter_args(%arg5 = %1) -> (vector<1x32xf32>)  : i32 {
      %c0_i32_38 = arith.constant 0 : i32
      %29 = arith.addi %0, %c0_i32_38 : i32
      %30 = arith.addi %29, %arg4 : i32
      %31 = arith.index_cast %30 : i32 to index
      %32 = memref.load %arg1[%31] : memref<64xi32, #tpu.memory_space<smem>>
      %33 = arith.index_cast %32 : i32 to index
      %c0_39 = arith.constant 0 : index
      %34 = vector.load %arg2[%33, %c0_39] : memref<64x32xf32, #tpu.memory_space<vmem>>, vector<1x32xf32>
      %35 = arith.addf %arg5, %34 : vector<1x32xf32>
      scf.yield %35 : vector<1x32xf32>
    }
    %c8_i32_0 = arith.constant 8 : i32
    %cst_1 = arith.constant 0.000000e+00 : f32
    %4 = vector.broadcast %cst_1 : f32 to vector<1x32xf32>
    %c0_i32_2 = arith.constant 0 : i32
    %c8_i32_3 = arith.constant 8 : i32
    %5 = arith.addi %c0_i32_2, %c8_i32_3 : i32
    %c1_i32_4 = arith.constant 1 : i32
    %6 = scf.for %arg4 = %c0_i32_2 to %5 step %c1_i32_4 iter_args(%arg5 = %4) -> (vector<1x32xf32>)  : i32 {
      %c8_i32_38 = arith.constant 8 : i32
      %29 = arith.addi %0, %c8_i32_38 : i32
      %30 = arith.addi %29, %arg4 : i32
      %31 = arith.index_cast %30 : i32 to index
      %32 = memref.load %arg1[%31] : memref<64xi32, #tpu.memory_space<smem>>
      %33 = arith.index_cast %32 : i32 to index
      %c0_39 = arith.constant 0 : index
      %34 = vector.load %arg2[%33, %c0_39] : memref<64x32xf32, #tpu.memory_space<vmem>>, vector<1x32xf32>
      %35 = arith.addf %arg5, %34 : vector<1x32xf32>
      scf.yield %35 : vector<1x32xf32>
    }
    %c8_i32_5 = arith.constant 8 : i32
    %cst_6 = arith.constant 0.000000e+00 : f32
    %7 = vector.broadcast %cst_6 : f32 to vector<1x32xf32>
    %c0_i32_7 = arith.constant 0 : i32
    %c8_i32_8 = arith.constant 8 : i32
    %8 = arith.addi %c0_i32_7, %c8_i32_8 : i32
    %c1_i32_9 = arith.constant 1 : i32
    %9 = scf.for %arg4 = %c0_i32_7 to %8 step %c1_i32_9 iter_args(%arg5 = %7) -> (vector<1x32xf32>)  : i32 {
      %c16_i32 = arith.constant 16 : i32
      %29 = arith.addi %0, %c16_i32 : i32
      %30 = arith.addi %29, %arg4 : i32
      %31 = arith.index_cast %30 : i32 to index
      %32 = memref.load %arg1[%31] : memref<64xi32, #tpu.memory_space<smem>>
      %33 = arith.index_cast %32 : i32 to index
      %c0_38 = arith.constant 0 : index
      %34 = vector.load %arg2[%33, %c0_38] : memref<64x32xf32, #tpu.memory_space<vmem>>, vector<1x32xf32>
      %35 = arith.addf %arg5, %34 : vector<1x32xf32>
      scf.yield %35 : vector<1x32xf32>
    }
    %c8_i32_10 = arith.constant 8 : i32
    %cst_11 = arith.constant 0.000000e+00 : f32
    %10 = vector.broadcast %cst_11 : f32 to vector<1x32xf32>
    %c0_i32_12 = arith.constant 0 : i32
    %c8_i32_13 = arith.constant 8 : i32
    %11 = arith.addi %c0_i32_12, %c8_i32_13 : i32
    %c1_i32_14 = arith.constant 1 : i32
    %12 = scf.for %arg4 = %c0_i32_12 to %11 step %c1_i32_14 iter_args(%arg5 = %10) -> (vector<1x32xf32>)  : i32 {
      %c24_i32 = arith.constant 24 : i32
      %29 = arith.addi %0, %c24_i32 : i32
      %30 = arith.addi %29, %arg4 : i32
      %31 = arith.index_cast %30 : i32 to index
      %32 = memref.load %arg1[%31] : memref<64xi32, #tpu.memory_space<smem>>
      %33 = arith.index_cast %32 : i32 to index
      %c0_38 = arith.constant 0 : index
      %34 = vector.load %arg2[%33, %c0_38] : memref<64x32xf32, #tpu.memory_space<vmem>>, vector<1x32xf32>
      %35 = arith.addf %arg5, %34 : vector<1x32xf32>
      scf.yield %35 : vector<1x32xf32>
    }
    %c8_i32_15 = arith.constant 8 : i32
    %cst_16 = arith.constant 0.000000e+00 : f32
    %13 = vector.broadcast %cst_16 : f32 to vector<1x32xf32>
    %c0_i32_17 = arith.constant 0 : i32
    %c8_i32_18 = arith.constant 8 : i32
    %14 = arith.addi %c0_i32_17, %c8_i32_18 : i32
    %c1_i32_19 = arith.constant 1 : i32
    %15 = scf.for %arg4 = %c0_i32_17 to %14 step %c1_i32_19 iter_args(%arg5 = %13) -> (vector<1x32xf32>)  : i32 {
      %c32_i32 = arith.constant 32 : i32
      %29 = arith.addi %0, %c32_i32 : i32
      %30 = arith.addi %29, %arg4 : i32
      %31 = arith.index_cast %30 : i32 to index
      %32 = memref.load %arg1[%31] : memref<64xi32, #tpu.memory_space<smem>>
      %33 = arith.index_cast %32 : i32 to index
      %c0_38 = arith.constant 0 : index
      %34 = vector.load %arg2[%33, %c0_38] : memref<64x32xf32, #tpu.memory_space<vmem>>, vector<1x32xf32>
      %35 = arith.addf %arg5, %34 : vector<1x32xf32>
      scf.yield %35 : vector<1x32xf32>
    }
    %c8_i32_20 = arith.constant 8 : i32
    %cst_21 = arith.constant 0.000000e+00 : f32
    %16 = vector.broadcast %cst_21 : f32 to vector<1x32xf32>
    %c0_i32_22 = arith.constant 0 : i32
    %c8_i32_23 = arith.constant 8 : i32
    %17 = arith.addi %c0_i32_22, %c8_i32_23 : i32
    %c1_i32_24 = arith.constant 1 : i32
    %18 = scf.for %arg4 = %c0_i32_22 to %17 step %c1_i32_24 iter_args(%arg5 = %16) -> (vector<1x32xf32>)  : i32 {
      %c40_i32 = arith.constant 40 : i32
      %29 = arith.addi %0, %c40_i32 : i32
      %30 = arith.addi %29, %arg4 : i32
      %31 = arith.index_cast %30 : i32 to index
      %32 = memref.load %arg1[%31] : memref<64xi32, #tpu.memory_space<smem>>
      %33 = arith.index_cast %32 : i32 to index
      %c0_38 = arith.constant 0 : index
      %34 = vector.load %arg2[%33, %c0_38] : memref<64x32xf32, #tpu.memory_space<vmem>>, vector<1x32xf32>
      %35 = arith.addf %arg5, %34 : vector<1x32xf32>
      scf.yield %35 : vector<1x32xf32>
    }
    %c8_i32_25 = arith.constant 8 : i32
    %cst_26 = arith.constant 0.000000e+00 : f32
    %19 = vector.broadcast %cst_26 : f32 to vector<1x32xf32>
    %c0_i32_27 = arith.constant 0 : i32
    %c8_i32_28 = arith.constant 8 : i32
    %20 = arith.addi %c0_i32_27, %c8_i32_28 : i32
    %c1_i32_29 = arith.constant 1 : i32
    %21 = scf.for %arg4 = %c0_i32_27 to %20 step %c1_i32_29 iter_args(%arg5 = %19) -> (vector<1x32xf32>)  : i32 {
      %c48_i32 = arith.constant 48 : i32
      %29 = arith.addi %0, %c48_i32 : i32
      %30 = arith.addi %29, %arg4 : i32
      %31 = arith.index_cast %30 : i32 to index
      %32 = memref.load %arg1[%31] : memref<64xi32, #tpu.memory_space<smem>>
      %33 = arith.index_cast %32 : i32 to index
      %c0_38 = arith.constant 0 : index
      %34 = vector.load %arg2[%33, %c0_38] : memref<64x32xf32, #tpu.memory_space<vmem>>, vector<1x32xf32>
      %35 = arith.addf %arg5, %34 : vector<1x32xf32>
      scf.yield %35 : vector<1x32xf32>
    }
    %c8_i32_30 = arith.constant 8 : i32
    %cst_31 = arith.constant 0.000000e+00 : f32
    %22 = vector.broadcast %cst_31 : f32 to vector<1x32xf32>
    %c0_i32_32 = arith.constant 0 : i32
    %c8_i32_33 = arith.constant 8 : i32
    %23 = arith.addi %c0_i32_32, %c8_i32_33 : i32
    %c1_i32_34 = arith.constant 1 : i32
    %24 = scf.for %arg4 = %c0_i32_32 to %23 step %c1_i32_34 iter_args(%arg5 = %22) -> (vector<1x32xf32>)  : i32 {
      %c56_i32 = arith.constant 56 : i32
      %29 = arith.addi %0, %c56_i32 : i32
      %30 = arith.addi %29, %arg4 : i32
      %31 = arith.index_cast %30 : i32 to index
      %32 = memref.load %arg1[%31] : memref<64xi32, #tpu.memory_space<smem>>
      %33 = arith.index_cast %32 : i32 to index
      %c0_38 = arith.constant 0 : index
      %34 = vector.load %arg2[%33, %c0_38] : memref<64x32xf32, #tpu.memory_space<vmem>>, vector<1x32xf32>
      %35 = arith.addf %arg5, %34 : vector<1x32xf32>
      scf.yield %35 : vector<1x32xf32>
    }
    %c8_i32_35 = arith.constant 8 : i32
    %25 = tpu.concatenate %3, %6, %9, %12, %15, %18, %21, %24 in 0 : vector<1x32xf32>, vector<1x32xf32>, vector<1x32xf32>, vector<1x32xf32>, vector<1x32xf32>, vector<1x32xf32>, vector<1x32xf32>, vector<1x32xf32> -> vector<8x32xf32>
    %cst_36 = arith.constant 1.250000e-01 : f32
    %26 = vector.broadcast %cst_36 : f32 to vector<8x32xf32>
    %27 = arith.mulf %25, %26 : vector<8x32xf32>
    %c0 = arith.constant 0 : index
    %c0_37 = arith.constant 0 : index
    %28 = vector.load %arg3[%c0, %c0_37] : memref<8x32xf32, #tpu.memory_space<vmem>>, vector<8x32xf32>
    tpu.vector_store %arg3[%c0, %c0_37], %27 {strides = array<i32>} : memref<8x32xf32, #tpu.memory_space<vmem>>, vector<8x32xf32>,
    return
  }
  func.func @transform_0(%arg0: i32, %arg1: memref<64xi32, #tpu.memory_space<smem>>) -> (i32, i32) {
    %c0_i32 = arith.constant 0 : i32
    %c0_i32_0 = arith.constant 0 : i32
    %c0_i32_1 = arith.constant 0 : i32
    return %c0_i32, %c0_i32_0 : i32, i32
  }
  func.func @transform_1(%arg0: i32, %arg1: memref<64xi32, #tpu.memory_space<smem>>) -> (i32, i32) {
    %c0_i32 = arith.constant 0 : i32
    %c0_i32_0 = arith.constant 0 : i32
    return %arg0, %c0_i32 : i32, i32
  }
}

</mosaic_0001>

<llo_original>
// kernel: tpu_custom_call.1
$region0: #{tpu_custom_call.1}
  #allocation0 [shape = 'u32[]', space=smem, size = 0x4, offset = 0x4, fixed_abs, tag = 'smem constant byte address 0x4 - core index']
  #allocation1 [shape = 'u32[144,128]{1,0:T(1,128)}', space=vmem, size = 0x12000, scoped, tag = 'internal scratch']
  #allocation2 [shape = 's32[1]{0}', space=sflag, size = 0x4, scoped, tag = 'scoped memory for tpu_custom_call.1']
  #allocation3 [shape = 'u8[512]{0}', space=smem, size = 0x200, scoped, tag = 'prefetched SMEM operand 0']
  %s0 = inlined_call_operand.vmem [shape: s32[64], index: 0, kind: input, shape index: {}]
  %s1 = inlined_call_operand.vmem [shape: f32[64,32], index: 1, kind: input, shape index: {}]
  %s2 = inlined_call_operand.hbm [shape: f32[8,32], index: 2, kind: output, shape index: {}]
  %s3 = sld [smem:[#allocation0]]
  $region70: #{tpu_custom_call.1} parent=0
    _
  %s5 = ssub.s32 1, %s3
  %s6 = scalar_select 0, %s5, %s3
  %s7 = sshll.u32 %s0, 4
  %s8 = int_to_ptr.vmem [resolvable:$true] %s7
  %10 = dma.vmem_to_smem %s8, 16, [#allocation3], [#allocation2]
  %11 = dma.done [#allocation2], 16
  %12 = sfence
  $region1: #{tpu_custom_call.1} parent=0
    #allocation4 [shape = 'u8[4096]{0}', space=vmem, size = 0x1000, scoped, tag = 'output window, operand 0, single buffered']
    #allocation5 [shape = 's32[1]{0}', space=sflag, size = 0x4, scoped, tag = 'scoped memory for tpu_custom_call.1']
    %13 = vsyncpa [#allocation5], 0
    // Predicated region
    $region2: #{tpu_custom_call.1} parent=1 // pred_check
      _
    $region3: #{tpu_custom_call.1} parent=1 // pred_check_branch
      %15 = sbr.rel (0) target = $region5
    $region4: #{tpu_custom_call.1} parent=1 // pred_region
      _
    $region5: #{tpu_custom_call.1} parent=1 // pred_fallthru
      _
    %s16 = smul.u32 0, 64
    loop: start=0, step=1, limit=8
    $region6: #{tpu_custom_call.1} parent=1 // loop_pre_header
      _
    $region7: #{tpu_custom_call.1} parent=1 // loop_header
      %s18 = sphi 0, %s22
      %p19 = scmp.ge.s32.totalorder %s18, 8
      %v23 = vphi 0.0, %v28
    $region8: #{tpu_custom_call.1} parent=1 // loop_header_branch
      %21 = sbr.rel (%p19) target = $region12
    $region9: #{tpu_custom_call.1} parent=1 // loop_body
      %s24 = sadd.s32 %s16, %s18
      %s25 = sld [smem:[#allocation3 + %s24]]
      %s26 = scalar_lea.vmem %s1, %s25
      %v27 = vld [vmem:[%s26] sm:$0x1]
      %v28 = vadd.f32 %v23, %v27
    $region10: #{tpu_custom_call.1} parent=1 // loop_footer
      %s22 = sadd.s32 1, %s18
    $region11: #{tpu_custom_call.1} parent=1 // loop_footer_branch
      %17 = sbr.rel target = $region7
    $region12: #{tpu_custom_call.1} parent=1 // loop_exit
      _
    loop: start=0, step=1, limit=8
    $region13: #{tpu_custom_call.1} parent=1 // loop_pre_header
      _
    $region14: #{tpu_custom_call.1} parent=1 // loop_header
      %s30 = sphi 0, %s34
      %p31 = scmp.ge.s32.totalorder %s30, 8
      %v35 = vphi 0.0, %v41
    $region15: #{tpu_custom_call.1} parent=1 // loop_header_branch
      %33 = sbr.rel (%p31) target = $region19
    $region16: #{tpu_custom_call.1} parent=1 // loop_body
      %s36 = sadd.s32 %s16, 8
      %s37 = sadd.s32 %s36, %s30
      %s38 = sld [smem:[#allocation3 + %s37]]
      %s39 = scalar_lea.vmem %s1, %s38
      %v40 = vld [vmem:[%s39] sm:$0x1]
      %v41 = vadd.f32 %v35, %v40
    $region17: #{tpu_custom_call.1} parent=1 // loop_footer
      %s34 = sadd.s32 1, %s30
    $region18: #{tpu_custom_call.1} parent=1 // loop_footer_branch
      %29 = sbr.rel target = $region14
    $region19: #{tpu_custom_call.1} parent=1 // loop_exit
      _
    loop: start=0, step=1, limit=8
    $region20: #{tpu_custom_call.1} parent=1 // loop_pre_header
      _
    $region21: #{tpu_custom_call.1} parent=1 // loop_header
      %s43 = sphi 0, %s47
      %p44 = scmp.ge.s32.totalorder %s43, 8
      %v48 = vphi 0.0, %v54
    $region22: #{tpu_custom_call.1} parent=1 // loop_header_branch
      %46 = sbr.rel (%p44) target = $region26
    $region23: #{tpu_custom_call.1} parent=1 // loop_body
      %s49 = sadd.s32 %s16, 16
      %s50 = sadd.s32 %s49, %s43
      %s51 = sld [smem:[#allocation3 + %s50]]
      %s52 = scalar_lea.vmem %s1, %s51
      %v53 = vld [vmem:[%s52] sm:$0x1]
      %v54 = vadd.f32 %v48, %v53
    $region24: #{tpu_custom_call.1} parent=1 // loop_footer
      %s47 = sadd.s32 1, %s43
    $region25: #{tpu_custom_call.1} parent=1 // loop_footer_branch
      %42 = sbr.rel target = $region21
    $region26: #{tpu_custom_call.1} parent=1 // loop_exit
      _
    loop: start=0, step=1, limit=8
    $region27: #{tpu_custom_call.1} parent=1 // loop_pre_header
      _
    $region28: #{tpu_custom_call.1} parent=1 // loop_header
      %s56 = sphi 0, %s60
      %p57 = scmp.ge.s32.totalorder %s56, 8
      %v61 = vphi 0.0, %v67
    $region29: #{tpu_custom_call.1} parent=1 // loop_header_branch
      %59 = sbr.rel (%p57) target = $region33
    $region30: #{tpu_custom_call.1} parent=1 // loop_body
      %s62 = sadd.s32 %s16, 24
      %s63 = sadd.s32 %s62, %s56
      %s64 = sld [smem:[#allocation3 + %s63]]
      %s65 = scalar_lea.vmem %s1, %s64
      %v66 = vld [vmem:[%s65] sm:$0x1]
      %v67 = vadd.f32 %v61, %v66
    $region31: #{tpu_custom_call.1} parent=1 // loop_footer
      %s60 = sadd.s32 1, %s56
    $region32: #{tpu_custom_call.1} parent=1 // loop_footer_branch
      %55 = sbr.rel target = $region28
    $region33: #{tpu_custom_call.1} parent=1 // loop_exit
      _
    loop: start=0, step=1, limit=8
    $region34: #{tpu_custom_call.1} parent=1 // loop_pre_header
      _
    $region35: #{tpu_custom_call.1} parent=1 // loop_header
      %s69 = sphi 0, %s73
      %p70 = scmp.ge.s32.totalorder %s69, 8
      %v74 = vphi 0.0, %v80
    $region36: #{tpu_custom_call.1} parent=1 // loop_header_branch
      %72 = sbr.rel (%p70) target = $region40
    $region37: #{tpu_custom_call.1} parent=1 // loop_body
      %s75 = sadd.s32 %s16, 32
      %s76 = sadd.s32 %s75, %s69
      %s77 = sld [smem:[#allocation3 + %s76]]
      %s78 = scalar_lea.vmem %s1, %s77
      %v79 = vld [vmem:[%s78] sm:$0x1]
      %v80 = vadd.f32 %v74, %v79
    $region38: #{tpu_custom_call.1} parent=1 // loop_footer
      %s73 = sadd.s32 1, %s69
    $region39: #{tpu_custom_call.1} parent=1 // loop_footer_branch
      %68 = sbr.rel target = $region35
    $region40: #{tpu_custom_call.1} parent=1 // loop_exit
      _
    loop: start=0, step=1, limit=8
    $region41: #{tpu_custom_call.1} parent=1 // loop_pre_header
      _
    $region42: #{tpu_custom_call.1} parent=1 // loop_header
      %s82 = sphi 0, %s86
      %p83 = scmp.ge.s32.totalorder %s82, 8
      %v87 = vphi 0.0, %v93
    $region43: #{tpu_custom_call.1} parent=1 // loop_header_branch
      %85 = sbr.rel (%p83) target = $region47
    $region44: #{tpu_custom_call.1} parent=1 // loop_body
      %s88 = sadd.s32 %s16, 40
      %s89 = sadd.s32 %s88, %s82
      %s90 = sld [smem:[#allocation3 + %s89]]
      %s91 = scalar_lea.vmem %s1, %s90
      %v92 = vld [vmem:[%s91] sm:$0x1]
      %v93 = vadd.f32 %v87, %v92
    $region45: #{tpu_custom_call.1} parent=1 // loop_footer
      %s86 = sadd.s32 1, %s82
    $region46: #{tpu_custom_call.1} parent=1 // loop_footer_branch
      %81 = sbr.rel target = $region42
    $region47: #{tpu_custom_call.1} parent=1 // loop_exit
      _
    loop: start=0, step=1, limit=8
    $region48: #{tpu_custom_call.1} parent=1 // loop_pre_header
      _
    $region49: #{tpu_custom_call.1} parent=1 // loop_header
      %s95 = sphi 0, %s99
      %p96 = scmp.ge.s32.totalorder %s95, 8
      %v100 = vphi 0.0, %v106
    $region50: #{tpu_custom_call.1} parent=1 // loop_header_branch
      %98 = sbr.rel (%p96) target = $region54
    $region51: #{tpu_custom_call.1} parent=1 // loop_body
      %s101 = sadd.s32 %s16, 48
      %s102 = sadd.s32 %s101, %s95
      %s103 = sld [smem:[#allocation3 + %s102]]
      %s104 = scalar_lea.vmem %s1, %s103
      %v105 = vld [vmem:[%s104] sm:$0x1]
      %v106 = vadd.f32 %v100, %v105
    $region52: #{tpu_custom_call.1} parent=1 // loop_footer
      %s99 = sadd.s32 1, %s95
    $region53: #{tpu_custom_call.1} parent=1 // loop_footer_branch
      %94 = sbr.rel target = $region49
    $region54: #{tpu_custom_call.1} parent=1 // loop_exit
      _
    loop: start=0, step=1, limit=8
    $region55: #{tpu_custom_call.1} parent=1 // loop_pre_header
      _
    $region56: #{tpu_custom_call.1} parent=1 // loop_header
      %s108 = sphi 0, %s112
      %p109 = scmp.ge.s32.totalorder %s108, 8
      %v113 = vphi 0.0, %v119
    $region57: #{tpu_custom_call.1} parent=1 // loop_header_branch
      %111 = sbr.rel (%p109) target = $region61
    $region58: #{tpu_custom_call.1} parent=1 // loop_body
      %s114 = sadd.s32 %s16, 56
      %s115 = sadd.s32 %s114, %s108
      %s116 = sld [smem:[#allocation3 + %s115]]
      %s117 = scalar_lea.vmem %s1, %s116
      %v118 = vld [vmem:[%s117] sm:$0x1]
      %v119 = vadd.f32 %v113, %v118
    $region59: #{tpu_custom_call.1} parent=1 // loop_footer
      %s112 = sadd.s32 1, %s108
    $region60: #{tpu_custom_call.1} parent=1 // loop_footer_branch
      %107 = sbr.rel target = $region56
    $region61: #{tpu_custom_call.1} parent=1 // loop_exit
      _
    %v121 = vrot.slane %v35, 7
    %v124 = vrot.slane %v48, 6
    %v127 = vrot.slane %v61, 5
    %v130 = vrot.slane %v74, 4
    %v133 = vrot.slane %v87, 3
    %v136 = vrot.slane %v100, 2
    %v139 = vrot.slane %v113, 1
    %vm141 = vcmask 1040384
    %v142 = vsel %vm141, %v23, %v121
    %vm143 = vcmask 1041408
    %v144 = vsel %vm143, %v142, %v124
    %vm145 = vcmask 1042432
    %v146 = vsel %vm145, %v144, %v127
    %vm147 = vcmask 1043456
    %v148 = vsel %vm147, %v146, %v130
    %vm149 = vcmask 1044480
    %v150 = vsel %vm149, %v148, %v133
    %vm151 = vcmask 1045504
    %v152 = vsel %vm151, %v150, %v136
    %vm153 = vcmask 1046528
    %v154 = vsel %vm153, %v152, %v139
    %v155 = vmul.f32 %v154, 0.125
    %vm156 = vcmask 261120
    %157 = vst.msk [vmem:[#allocation4] sm:$0xff] %vm156, %v155
    // Predicated region
    $region62: #{tpu_custom_call.1} parent=1 // pred_check
      _
    $region63: #{tpu_custom_call.1} parent=1 // pred_check_branch
      %159 = sbr.rel (0) target = $region65
    $region64: #{tpu_custom_call.1} parent=1 // pred_region
      %s161 = ssub.s32 128, 128
      %162 = vsyncadd [#allocation5], %s161
      %s164 = sshll.u32 [#allocation4], 4
      %s165 = int_to_ptr.vmem [resolvable:$true] %s164
      %167 = dma.vmem_to_hbm [thread:$0]  %s165, 128, %s2, [#allocation5]
    $region65: #{tpu_custom_call.1} parent=1 // pred_fallthru
      _
    // Predicated region
    $region66: #{tpu_custom_call.1} parent=1 // pred_check
      _
    $region67: #{tpu_custom_call.1} parent=1 // pred_check_branch
      %169 = sbr.rel (0) target = $region69
    $region68: #{tpu_custom_call.1} parent=1 // pred_region
      %170 = dma.done [#allocation5], 128
    $region69: #{tpu_custom_call.1} parent=1 // pred_fallthru
      _
    %171 = vsyncpa [#allocation5], 1

</llo_original>
